<compile_context>
chip_gen: v5e
topology: v5e:2x2
jax: 0.10.0
libtpu: 0.0.40
codegen_flags: <defaults>
</compile_context>

<pallas_src>
import jax
import jax.numpy as jnp
from jax.experimental import pallas as pl
from jax.experimental.pallas import tpu as pltpu

STATE_DIM = 2    # MountainCarContinuous observation dim
ACTION_DIM = 1   # MountainCarContinuous action dim
HIDDEN = 256


def critic_kernel(s_ref, a_ref, w1_ref, b1_ref, w2_ref, b2_ref, w3_ref, b3_ref,
                  out_ref):
    # s_ref: (TB, 2), a_ref: (TB, 1)
    s = s_ref[...].astype(jnp.float32)
    a = a_ref[...].astype(jnp.float32)

    # fc1 + relu : K=3 contraction done as three broadcast FMAs on the VPU
    # (keeps the MXU free; f32 elementwise so it is also safe on v5e).
    w1 = w1_ref[...].astype(jnp.float32)          # (3, H)
    h1 = (s[:, 0:1] * w1[0:1, :]
          + s[:, 1:2] * w1[1:2, :]
          + a[:, 0:1] * w1[2:3, :]
          + b1_ref[...])                          # (TB, H) f32
    h1 = jnp.maximum(h1, 0.0)

    # fc2 + relu : the only real MXU matmul (256x256).  The activation is cast
    # to w2's storage dtype (bf16 on the default path -> single-pass MXU),
    # accumulation and epilogue stay f32.
    h2 = jnp.dot(h1.astype(w2_ref.dtype), w2_ref[...],
                 preferred_element_type=jnp.float32) + b2_ref[...]
    h2 = jnp.maximum(h2, 0.0)                     # (TB, H) f32

    # fc3 : N=1 output column -> VPU multiply + lane (XLU) reduction.
    w3 = w3_ref[...].astype(jnp.float32)          # (1, H)
    out_ref[...] = (jnp.sum(h2 * w3, axis=-1, keepdims=True)
                    + b3_ref[0, 0]).astype(out_ref.dtype)


def critic_forward(state, action, params, *, block_b=2048,
                   mxu_dtype=jnp.bfloat16):
    """state: (B, STATE_DIM), action: (B, ACTION_DIM) -> (B, 1) value.

    mxu_dtype: storage/compute dtype for the fc2 weights on the MXU.
      Default bf16 (fast path on all generations, f32 accumulation).
      Pass jnp.float32 for bit-tight parity with the f32 reference.
    """
    state = state.astype(jnp.float32)
    action = action.astype(jnp.float32)
    B = state.shape[0]
    w1, b1, w2, b2, w3, b3 = params

    # bf16 weights are the default for fc2 (single MXU pass, half the weight
    # DMA).  w1/w3 are consumed on the VPU in f32, so their storage dtype is
    # irrelevant to the critical path.
    if mxu_dtype is not None and w2.dtype != mxu_dtype:
        w2 = w2.astype(mxu_dtype)

    def round_up(x, m):
        return ((x + m - 1) // m) * m

    # Batch-tile selection (f32 inputs -> sublane minimum of 8 rows).
    if B <= block_b:
        if B >= 16:
            # Guarantee >= 2 grid steps so ("parallel",) can shard the batch
            # across v7x's two TensorCores; harmless on single-TC v5e/v6e.
            TB = round_up(pl.cdiv(B, 2), 8)
        else:
            TB = max(8, round_up(B, 8))
    else:
        TB = block_b
    Bp = round_up(B, TB)
    if Bp != B:
        state = jnp.pad(state, ((0, Bp - B), (0, 0)))
        action = jnp.pad(action, ((0, Bp - B), (0, 0)))
    grid = (Bp // TB,)

    def batched(feat):
        return pl.BlockSpec((TB, feat), lambda i: (i, 0))

    def resident(shape):
        # Constant index_map: fetched into VMEM once, stays resident across
        # every batch tile.  (Single-buffering these would save ~0.13-0.26 MiB
        # of dead double-buffer VMEM, but headroom is >10x, so not worth it.)
        return pl.BlockSpec(shape, lambda i: (0, 0))

    compiler_kwargs = dict(dimension_semantics=("parallel",))   # v7x: 2 TCs
    if TB > 2048:
        # Tiles beyond 2048 rows outgrow v5e's 16 MiB scoped-VMEM default
        # (f32 h1/h2 + Mosaic matmul temporaries scale linearly with TB).
        compiler_kwargs["vmem_limit_bytes"] = int(
            min(48 * 1024 * 1024, max(32 * 1024 * 1024, 16 * TB * HIDDEN)))

    out = pl.pallas_call(
        critic_kernel,
        out_shape=jax.ShapeDtypeStruct((Bp, 1), jnp.float32),
        grid=grid,
        in_specs=[
            batched(state.shape[1]),                              # state
            batched(action.shape[1]),                             # action
            resident(w1.shape),                                   # w1 (3, H)
            resident(b1.shape),                                   # b1 (1, H)
            resident(w2.shape),                                   # w2 (H, H)
            resident(b2.shape),                                   # b2 (1, H)
            resident(w3.shape),                                   # w3 (1, H)
            pl.BlockSpec(memory_space=pltpu.MemorySpace.SMEM),    # b3 (1, 1)
        ],
        out_specs=pl.BlockSpec((TB, 1), lambda i: (i, 0)),
        compiler_params=pltpu.CompilerParams(**compiler_kwargs),
    )(state, action, w1, b1, w2, b2, w3, b3)
    return out[:B]


def init_params(key):
    """Synthetic f32 params. Weights stored (in_features, out_features); w3 as
    a (1, HIDDEN) row vector; biases (1, out); b3 is a (1, 1) scalar."""
    in_dim = STATE_DIM + ACTION_DIM
    k1, k2, k3, k4, k5, k6 = jax.random.split(key, 6)

    def uinit(k, shape, fan_in):
        bound = 1.0 / jnp.sqrt(fan_in)
        return jax.random.uniform(k, shape, jnp.float32, -bound, bound)

    w1 = uinit(k1, (in_dim, HIDDEN), in_dim)
    b1 = uinit(k2, (1, HIDDEN), in_dim)
    w2 = uinit(k3, (HIDDEN, HIDDEN), HIDDEN)
    b2 = uinit(k4, (1, HIDDEN), HIDDEN)
    w3 = uinit(k5, (1, HIDDEN), HIDDEN)   # row vector for the VPU fc3
    b3 = uinit(k6, (1, 1), HIDDEN)
    return (w1, b1, w2, b2, w3, b3)


def reference_forward(state, action, params):
    """Pure-JAX f32 reference for correctness checking."""
    w1, b1, w2, b2, w3, b3 = [p.astype(jnp.float32) for p in params]
    x = jnp.concatenate([state, action], axis=1).astype(jnp.float32)
    h1 = jnp.maximum(x @ w1 + b1, 0.0)
    h2 = jnp.maximum(h1 @ w2 + b2, 0.0)
    return h2 @ w3.T + b3


if __name__ == "__main__":
    key = jax.random.PRNGKey(0)
    kp, ks, ka = jax.random.split(key, 3)

    params = init_params(kp)

    # --- small batch, default bf16 MXU path (precision contract: fc2 runs
    #     bf16 x bf16 with f32 accumulation -> relaxed tolerance) ---
    B = 8
    state = jax.random.normal(ks, (B, STATE_DIM), jnp.float32)
    action = jax.random.normal(ka, (B, ACTION_DIM), jnp.float32)
    ref = reference_forward(state, action, params)

    out = jax.block_until_ready(critic_forward(state, action, params))
    assert out.shape == (B, 1), out.shape
    assert jnp.allclose(out, ref, atol=5e-2, rtol=5e-2), (out, ref)

    # --- f32 MXU verification path (tight tolerance) ---
    out_f32 = jax.block_until_ready(
        critic_forward(state, action, params, mxu_dtype=jnp.float32))
    assert out_f32.shape == (B, 1), out_f32.shape
    assert jnp.allclose(out_f32, ref, atol=1e-5, rtol=1e-5), (out_f32, ref)

    # --- B >= 16 splits into >= 2 tiles (v7x megacore path) with padding:
    #     B=24 -> TB=16, Bp=32, grid=(2,) ---
    B2 = 24
    ks2, ka2 = jax.random.split(jax.random.PRNGKey(1))
    state2 = jax.random.normal(ks2, (B2, STATE_DIM), jnp.float32)
    action2 = jax.random.normal(ka2, (B2, ACTION_DIM), jnp.float32)
    out2 = jax.block_until_ready(critic_forward(state2, action2, params))
    ref2 = reference_forward(state2, action2, params)
    assert out2.shape == (B2, 1), out2.shape
    assert jnp.allclose(out2, ref2, atol=5e-2, rtol=5e-2), (out2, ref2)

    # --- B > block_b pipelined-grid path: B=40, block_b=16 -> grid=(3,) ---
    B3 = 40
    ks3, ka3 = jax.random.split(jax.random.PRNGKey(2))
    state3 = jax.random.normal(ks3, (B3, STATE_DIM), jnp.float32)
    action3 = jax.random.normal(ka3, (B3, ACTION_DIM), jnp.float32)
    out3 = jax.block_until_ready(
        critic_forward(state3, action3, params, block_b=16))
    ref3 = reference_forward(state3, action3, params)
    assert out3.shape == (B3, 1), out3.shape
    assert jnp.allclose(out3, ref3, atol=5e-2, rtol=5e-2), (out3, ref3)

    print("KERNEL_OK")
</pallas_src>

<mosaic_0001>
module attributes {stable_mosaic.version = 11 : i64} {
  func.func @critic_kernel(%arg0: i32, %arg1: memref<8x2xf32, #tpu.memory_space<vmem>>, %arg2: memref<8x1xf32, #tpu.memory_space<vmem>>, %arg3: memref<3x256xf32, #tpu.memory_space<vmem>>, %arg4: memref<1x256xf32, #tpu.memory_space<vmem>>, %arg5: memref<256x256xbf16, #tpu.memory_space<vmem>>, %arg6: memref<1x256xf32, #tpu.memory_space<vmem>>, %arg7: memref<1x256xf32, #tpu.memory_space<vmem>>, %arg8: memref<1x1xf32, #tpu.memory_space<smem>>, %arg9: memref<8x1xf32, #tpu.memory_space<vmem>>) attributes {dimension_semantics = [#tpu.dimension_semantics<parallel>], iteration_bounds = array<i64: 1>, scalar_prefetch = 0 : i64, scratch_operands = 0 : i64, tpu.core_type = #tpu.core_type<tc>, window_params = [{transform_indices = @transform_0, window_bounds = array<i64: 8, 2>}, {transform_indices = @transform_1, window_bounds = array<i64: 8, 1>}, {pipeline_mode = #tpu.pipeline_mode<synchronous>, transform_indices = @transform_2, window_bounds = array<i64: 3, 256>}, {pipeline_mode = #tpu.pipeline_mode<synchronous>, transform_indices = @transform_3, window_bounds = array<i64: 1, 256>}, {pipeline_mode = #tpu.pipeline_mode<synchronous>, transform_indices = @transform_4, window_bounds = array<i64: 256, 256>}, {pipeline_mode = #tpu.pipeline_mode<synchronous>, transform_indices = @transform_5, window_bounds = array<i64: 1, 256>}, {pipeline_mode = #tpu.pipeline_mode<synchronous>, transform_indices = @transform_6, window_bounds = array<i64: 1, 256>}, {transform_indices = @transform_7, window_bounds = array<i64: 1, 1>}, {transform_indices = @transform_8, window_bounds = array<i64: 8, 1>}]} {
    %c0 = arith.constant 0 : index
    %c0_0 = arith.constant 0 : index
    %0 = vector.load %arg1[%c0, %c0_0] : memref<8x2xf32, #tpu.memory_space<vmem>>, vector<8x2xf32>
    %c0_1 = arith.constant 0 : index
    %c0_2 = arith.constant 0 : index
    %1 = vector.load %arg2[%c0_1, %c0_2] : memref<8x1xf32, #tpu.memory_space<vmem>>, vector<8x1xf32>
    %c0_3 = arith.constant 0 : index
    %c0_4 = arith.constant 0 : index
    %2 = vector.load %arg3[%c0_3, %c0_4] : memref<3x256xf32, #tpu.memory_space<vmem>>, vector<3x256xf32>
    %3 = vector.extract_strided_slice %0 {offsets = [0, 0], sizes = [8, 1], strides = [1, 1]} : vector<8x2xf32> to vector<8x1xf32>
    %4 = vector.extract_strided_slice %2 {offsets = [0, 0], sizes = [1, 256], strides = [1, 1]} : vector<3x256xf32> to vector<1x256xf32>
    %5 = vector.broadcast %3 : vector<8x1xf32> to vector<8x256xf32>
    %6 = vector.broadcast %4 : vector<1x256xf32> to vector<8x256xf32>
    %7 = arith.mulf %5, %6 : vector<8x256xf32>
    %8 = vector.extract_strided_slice %0 {offsets = [0, 1], sizes = [8, 1], strides = [1, 1]} : vector<8x2xf32> to vector<8x1xf32>
    %9 = vector.extract_strided_slice %2 {offsets = [1, 0], sizes = [1, 256], strides = [1, 1]} : vector<3x256xf32> to vector<1x256xf32>
    %10 = vector.broadcast %8 : vector<8x1xf32> to vector<8x256xf32>
    %11 = vector.broadcast %9 : vector<1x256xf32> to vector<8x256xf32>
    %12 = arith.mulf %10, %11 : vector<8x256xf32>
    %13 = arith.addf %7, %12 : vector<8x256xf32>
    %14 = vector.extract_strided_slice %2 {offsets = [2, 0], sizes = [1, 256], strides = [1, 1]} : vector<3x256xf32> to vector<1x256xf32>
    %15 = vector.broadcast %1 : vector<8x1xf32> to vector<8x256xf32>
    %16 = vector.broadcast %14 : vector<1x256xf32> to vector<8x256xf32>
    %17 = arith.mulf %15, %16 : vector<8x256xf32>
    %18 = arith.addf %13, %17 : vector<8x256xf32>
    %c0_5 = arith.constant 0 : index
    %c0_6 = arith.constant 0 : index
    %19 = vector.load %arg4[%c0_5, %c0_6] : memref<1x256xf32, #tpu.memory_space<vmem>>, vector<1x256xf32>
    %20 = vector.broadcast %19 : vector<1x256xf32> to vector<8x256xf32>
    %21 = arith.addf %18, %20 : vector<8x256xf32>
    %cst = arith.constant 0.000000e+00 : f32
    %22 = vector.broadcast %cst : f32 to vector<8x256xf32>
    %23 = arith.maximumf %21, %22 : vector<8x256xf32>
    %24 = arith.truncf %23 : vector<8x256xf32> to vector<8x256xbf16>
    %c0_7 = arith.constant 0 : index
    %c0_8 = arith.constant 0 : index
    %25 = vector.load %arg5[%c0_7, %c0_8] : memref<256x256xbf16, #tpu.memory_space<vmem>>, vector<256x256xbf16>
    %cst_9 = arith.constant dense<0.000000e+00> : vector<8x256xf32>
    %26 = tpu.matmul %24, %25, %cst_9 {dimension_numbers = #tpu.dot_dimension_numbers<[1], [0], [0], [1], [0, 0, 1, 1], [], []>} : vector<8x256xbf16>, vector<256x256xbf16>, vector<8x256xf32> -> vector<8x256xf32>
    %c0_10 = arith.constant 0 : index
    %c0_11 = arith.constant 0 : index
    %27 = vector.load %arg6[%c0_10, %c0_11] : memref<1x256xf32, #tpu.memory_space<vmem>>, vector<1x256xf32>
    %28 = vector.broadcast %27 : vector<1x256xf32> to vector<8x256xf32>
    %29 = arith.addf %26, %28 : vector<8x256xf32>
    %cst_12 = arith.constant 0.000000e+00 : f32
    %30 = vector.broadcast %cst_12 : f32 to vector<8x256xf32>
    %31 = arith.maximumf %29, %30 : vector<8x256xf32>
    %c0_13 = arith.constant 0 : index
    %c0_14 = arith.constant 0 : index
    %32 = vector.load %arg7[%c0_13, %c0_14] : memref<1x256xf32, #tpu.memory_space<vmem>>, vector<1x256xf32>
    %33 = vector.broadcast %32 : vector<1x256xf32> to vector<8x256xf32>
    %34 = arith.mulf %31, %33 : vector<8x256xf32>
    %cst_15 = arith.constant dense<0.000000e+00> : vector<8xf32>
    %35 = vector.multi_reduction <add>, %34, %cst_15 [1] : vector<8x256xf32> to vector<8xf32>
    %36 = vector.shape_cast %35 : vector<8xf32> to vector<8x1xf32>
    %c0_16 = arith.constant 0 : index
    %c0_17 = arith.constant 0 : index
    %37 = memref.load %arg8[%c0_16, %c0_17] : memref<1x1xf32, #tpu.memory_space<smem>>
    %38 = vector.broadcast %37 : f32 to vector<8x1xf32>
    %39 = arith.addf %36, %38 : vector<8x1xf32>
    %c0_18 = arith.constant 0 : index
    %c0_19 = arith.constant 0 : index
    %40 = vector.load %arg9[%c0_18, %c0_19] : memref<8x1xf32, #tpu.memory_space<vmem>>, vector<8x1xf32>
    tpu.vector_store %arg9[%c0_18, %c0_19], %39 {strides = array<i32>} : memref<8x1xf32, #tpu.memory_space<vmem>>, vector<8x1xf32>,
    return
  }
  func.func @transform_0(%arg0: i32) -> (i32, i32) {
    %c0_i32 = arith.constant 0 : i32
    %c0_i32_0 = arith.constant 0 : i32
    return %arg0, %c0_i32 : i32, i32
  }
  func.func @transform_1(%arg0: i32) -> (i32, i32) {
    %c0_i32 = arith.constant 0 : i32
    %c0_i32_0 = arith.constant 0 : i32
    return %arg0, %c0_i32 : i32, i32
  }
  func.func @transform_2(%arg0: i32) -> (i32, i32) {
    %c0_i32 = arith.constant 0 : i32
    %c0_i32_0 = arith.constant 0 : i32
    %c0_i32_1 = arith.constant 0 : i32
    return %c0_i32, %c0_i32_0 : i32, i32
  }
  func.func @transform_3(%arg0: i32) -> (i32, i32) {
    %c0_i32 = arith.constant 0 : i32
    %c0_i32_0 = arith.constant 0 : i32
    %c0_i32_1 = arith.constant 0 : i32
    return %c0_i32, %c0_i32_0 : i32, i32
  }
  func.func @transform_4(%arg0: i32) -> (i32, i32) {
    %c0_i32 = arith.constant 0 : i32
    %c0_i32_0 = arith.constant 0 : i32
    %c0_i32_1 = arith.constant 0 : i32
    return %c0_i32, %c0_i32_0 : i32, i32
  }
  func.func @transform_5(%arg0: i32) -> (i32, i32) {
    %c0_i32 = arith.constant 0 : i32
    %c0_i32_0 = arith.constant 0 : i32
    %c0_i32_1 = arith.constant 0 : i32
    return %c0_i32, %c0_i32_0 : i32, i32
  }
  func.func @transform_6(%arg0: i32) -> (i32, i32) {
    %c0_i32 = arith.constant 0 : i32
    %c0_i32_0 = arith.constant 0 : i32
    %c0_i32_1 = arith.constant 0 : i32
    return %c0_i32, %c0_i32_0 : i32, i32
  }
  func.func @transform_7(%arg0: i32) -> (i32, i32) {
    %c0_i32 = arith.constant 0 : i32
    %c0_i32_0 = arith.constant 0 : i32
    %c0_i32_1 = arith.constant 0 : i32
    return %c0_i32, %c0_i32_0 : i32, i32
  }
  func.func @transform_8(%arg0: i32) -> (i32, i32) {
    %c0_i32 = arith.constant 0 : i32
    %c0_i32_0 = arith.constant 0 : i32
    return %arg0, %c0_i32 : i32, i32
  }
}

</mosaic_0001>

<llo_original>
// kernel: tpu_custom_call.1
$region0: #{tpu_custom_call.1}
  #allocation0 [shape = 'u32[]', space=smem, size = 0x4, offset = 0x4, fixed_abs, tag = 'smem constant byte address 0x4 - core index']
  #allocation1 [shape = 'u32[72,128]{1,0:T(1,128)}', space=vmem, size = 0x9000, scoped, tag = 'internal scratch']
  #allocation2 [shape = 'f32[1,1]{1,0:T(1,128)S(6)}', space=smem, size = 0x200, scoped, tag = 'scoped memory for tpu_custom_call.1']
  %s0 = inlined_call_operand.vmem [shape: f32[8,2], index: 0, kind: input, shape index: {}]
  %s1 = inlined_call_operand.vmem [shape: f32[8,1], index: 1, kind: input, shape index: {}]
  %s2 = inlined_call_operand.vmem [shape: f32[3,256], index: 2, kind: input, shape index: {}]
  %s3 = inlined_call_operand.vmem [shape: f32[1,256], index: 3, kind: input, shape index: {}]
  %s4 = inlined_call_operand.hbm [shape: bf16[256,256], index: 4, kind: input, shape index: {}]
  %s5 = inlined_call_operand.vmem [shape: f32[1,256], index: 5, kind: input, shape index: {}]
  %s6 = inlined_call_operand.vmem [shape: f32[1,256], index: 6, kind: input, shape index: {}]
  %s7 = inlined_call_operand.<no memory space> [shape: f32[1,1], index: 7, kind: input, shape index: {}]
  %s8 = inlined_call_operand.vmem [shape: f32[8,1], index: 8, kind: output, shape index: {}]
  %s9 = sld [smem:[#allocation0]]
  $region46: #{tpu_custom_call.1} parent=0
    _
  %s11 = ssub.s32 1, %s9
  %s12 = scalar_select 0, %s11, %s9
  %13 = sst [smem:[#allocation2]] %s7
  $region1: #{tpu_custom_call.1} parent=0
    #allocation3 [shape = 'u8[131072]{0}', space=vmem, size = 0x20000, scoped, tag = 'input window, operand 4, single buffered']
    #allocation4 [shape = 's32[1]{0}', space=sflag, size = 0x4, scoped, tag = 'scoped memory for tpu_custom_call.1']
    %14 = vsyncpa [#allocation4], 0
    // Predicated region
    $region2: #{tpu_custom_call.1} parent=1 // pred_check
      _
    $region3: #{tpu_custom_call.1} parent=1 // pred_check_branch
      %16 = sbr.rel (0) target = $region5
    $region4: #{tpu_custom_call.1} parent=1 // pred_region
      _
    $region5: #{tpu_custom_call.1} parent=1 // pred_fallthru
      _
    // Predicated region
    $region6: #{tpu_custom_call.1} parent=1 // pred_check
      _
    $region7: #{tpu_custom_call.1} parent=1 // pred_check_branch
      %18 = sbr.rel (0) target = $region9
    $region8: #{tpu_custom_call.1} parent=1 // pred_region
      _
    $region9: #{tpu_custom_call.1} parent=1 // pred_fallthru
      _
    // Predicated region
    $region10: #{tpu_custom_call.1} parent=1 // pred_check
      _
    $region11: #{tpu_custom_call.1} parent=1 // pred_check_branch
      %20 = sbr.rel (0) target = $region13
    $region12: #{tpu_custom_call.1} parent=1 // pred_region
      _
    $region13: #{tpu_custom_call.1} parent=1 // pred_fallthru
      _
    // Predicated region
    $region14: #{tpu_custom_call.1} parent=1 // pred_check
      _
    $region15: #{tpu_custom_call.1} parent=1 // pred_check_branch
      %22 = sbr.rel (0) target = $region17
    $region16: #{tpu_custom_call.1} parent=1 // pred_region
      _
    $region17: #{tpu_custom_call.1} parent=1 // pred_fallthru
      _
    // Predicated region
    $region18: #{tpu_custom_call.1} parent=1 // pred_check
      _
    $region19: #{tpu_custom_call.1} parent=1 // pred_check_branch
      %24 = sbr.rel (0) target = $region21
    $region20: #{tpu_custom_call.1} parent=1 // pred_region
      %26 = vsyncadd [#allocation4], 0
      %s27 = sshll.u32 %s4, 4
      %s28 = int_to_ptr.hbm [resolvable:$true] %s27
      %s29 = sshll.u32 [#allocation3], 4
      %s30 = int_to_ptr.vmem [resolvable:$true] %s29
      %35 = dma.hbm_to_vmem [thread:$0]  %s28, 4096, %s30, [#allocation4], 128, 128, 8
    $region21: #{tpu_custom_call.1} parent=1 // pred_fallthru
      _
    // Predicated region
    $region22: #{tpu_custom_call.1} parent=1 // pred_check
      _
    $region23: #{tpu_custom_call.1} parent=1 // pred_check_branch
      %37 = sbr.rel (0) target = $region25
    $region24: #{tpu_custom_call.1} parent=1 // pred_region
      _
    $region25: #{tpu_custom_call.1} parent=1 // pred_fallthru
      _
    // Predicated region
    $region26: #{tpu_custom_call.1} parent=1 // pred_check
      _
    $region27: #{tpu_custom_call.1} parent=1 // pred_check_branch
      %39 = sbr.rel (0) target = $region29
    $region28: #{tpu_custom_call.1} parent=1 // pred_region
      _
    $region29: #{tpu_custom_call.1} parent=1 // pred_fallthru
      _
    // Predicated region
    $region30: #{tpu_custom_call.1} parent=1 // pred_check
      _
    $region31: #{tpu_custom_call.1} parent=1 // pred_check_branch
      %41 = sbr.rel (0) target = $region33
    $region32: #{tpu_custom_call.1} parent=1 // pred_region
      _
    $region33: #{tpu_custom_call.1} parent=1 // pred_fallthru
      _
    // Predicated region
    $region34: #{tpu_custom_call.1} parent=1 // pred_check
      _
    $region35: #{tpu_custom_call.1} parent=1 // pred_check_branch
      %43 = sbr.rel (0) target = $region37
    $region36: #{tpu_custom_call.1} parent=1 // pred_region
      %45 = dma.done [#allocation4], 4096
    $region37: #{tpu_custom_call.1} parent=1 // pred_fallthru
      _
    %v46 = vld [vmem:[%s0] sm:$0xff]
    %v47 = vld [vmem:[%s1] sm:$0xff]
    %v48 = vld [vmem:[%s2] sm:$0x77]
    %50 = vset.pattern.permute.xlu0 0
    %51 = vperm.xlu0 %50, %v46
    %v52 = vpop.permute.xlu0 %51
    %v55 = vperm.slane %v48, 0
    %v56 = vperm.slane %v48, 4
    %v59 = vperm.slane %v55, 0
    %v60 = vperm.slane %v56, 0
    %v61 = vmul.f32 %v52, %v59
    %v62 = vmul.f32 %v52, %v60
    %63 = vset.pattern.permute.xlu0 1
    %64 = vperm.xlu0 %63, %v46
    %v65 = vpop.permute.xlu0 %64
    %v67 = vperm.slane %v48, 1
    %v68 = vperm.slane %v48, 5
    %v71 = vperm.slane %v67, 1
    %v72 = vperm.slane %v68, 1
    %v73 = vmul.f32 %v65, %v71
    %v74 = vmul.f32 %v65, %v72
    %v75 = vadd.f32 %v61, %v73
    %v76 = vadd.f32 %v62, %v74
    %78 = vset.pattern.permute.xlu0 0
    %79 = vperm.xlu0 %78, %v47
    %v80 = vpop.permute.xlu0 %79
    %v82 = vperm.slane %v48, 2
    %v83 = vperm.slane %v48, 6
    %v86 = vperm.slane %v82, 2
    %v87 = vperm.slane %v83, 2
    %v88 = vmul.f32 %v80, %v86
    %v89 = vmul.f32 %v80, %v87
    %v90 = vadd.f32 %v75, %v88
    %v91 = vadd.f32 %v76, %v89
    %v92 = vld [vmem:[%s3] sm:$0x3]
    %v94 = vperm.slane %v92, 0
    %v95 = vperm.slane %v92, 1
    %v98 = vadd.f32 %v90, %v94
    %v99 = vadd.f32 %v91, %v95
    %v100 = vmax.f32 %v98, 0.0
    %v101 = vmax.f32 %v99, 0.0
    %v102 = vpack.c.bf16 %v100, %v100
    %v103 = vpack.c.bf16 %v101, %v101
    %v104 = vld [vmem:[#allocation3] sm:$0xff]
    %v105 = vld [vmem:[#allocation3 + $0x8] sm:$0xff]
    %v106 = vld [vmem:[#allocation3 + $0x10] sm:$0xff]
    %v107 = vld [vmem:[#allocation3 + $0x18] sm:$0xff]
    %v108 = vld [vmem:[#allocation3 + $0x20] sm:$0xff]
    %v109 = vld [vmem:[#allocation3 + $0x28] sm:$0xff]
    %v110 = vld [vmem:[#allocation3 + $0x30] sm:$0xff]
    %v111 = vld [vmem:[#allocation3 + $0x38] sm:$0xff]
    %v112 = vld [vmem:[#allocation3 + $0x40] sm:$0xff]
    %v113 = vld [vmem:[#allocation3 + $0x48] sm:$0xff]
    %v114 = vld [vmem:[#allocation3 + $0x50] sm:$0xff]
    %v115 = vld [vmem:[#allocation3 + $0x58] sm:$0xff]
    %v116 = vld [vmem:[#allocation3 + $0x60] sm:$0xff]
    %v117 = vld [vmem:[#allocation3 + $0x68] sm:$0xff]
    %v118 = vld [vmem:[#allocation3 + $0x70] sm:$0xff]
    %v119 = vld [vmem:[#allocation3 + $0x78] sm:$0xff]
    %v120 = vld [vmem:[#allocation3 + $0x80] sm:$0xff]
    %v121 = vld [vmem:[#allocation3 + $0x88] sm:$0xff]
    %v122 = vld [vmem:[#allocation3 + $0x90] sm:$0xff]
    %v123 = vld [vmem:[#allocation3 + $0x98] sm:$0xff]
    %v124 = vld [vmem:[#allocation3 + $0xa0] sm:$0xff]
    %v125 = vld [vmem:[#allocation3 + $0xa8] sm:$0xff]
    %v126 = vld [vmem:[#allocation3 + $0xb0] sm:$0xff]
    %v127 = vld [vmem:[#allocation3 + $0xb8] sm:$0xff]
    %v128 = vld [vmem:[#allocation3 + $0xc0] sm:$0xff]
    %v129 = vld [vmem:[#allocation3 + $0xc8] sm:$0xff]
    %v130 = vld [vmem:[#allocation3 + $0xd0] sm:$0xff]
    %v131 = vld [vmem:[#allocation3 + $0xd8] sm:$0xff]
    %v132 = vld [vmem:[#allocation3 + $0xe0] sm:$0xff]
    %v133 = vld [vmem:[#allocation3 + $0xe8] sm:$0xff]
    %v134 = vld [vmem:[#allocation3 + $0xf0] sm:$0xff]
    %v135 = vld [vmem:[#allocation3 + $0xf8] sm:$0xff]
    %v136 = vld [vmem:[%s5] sm:$0x3]
    %v138 = vperm.slane %v136, 0
    %v139 = vperm.slane %v136, 1
    %v174 = vunpack.c.l.b16 %v104
    %v175 = vunpack.c.h.b16 %v104
    %v176 = vunpack.c.l.b16 %v105
    %v177 = vunpack.c.h.b16 %v105
    %v178 = vunpack.c.l.b16 %v106
    %v179 = vunpack.c.h.b16 %v106
    %v180 = vunpack.c.l.b16 %v107
    %v181 = vunpack.c.h.b16 %v107
    %v182 = vunpack.c.l.b16 %v108
    %v183 = vunpack.c.h.b16 %v108
    %v184 = vunpack.c.l.b16 %v109
    %v185 = vunpack.c.h.b16 %v109
    %v186 = vunpack.c.l.b16 %v110
    %v187 = vunpack.c.h.b16 %v110
    %v188 = vunpack.c.l.b16 %v111
    %v189 = vunpack.c.h.b16 %v111
    %v190 = vunpack.c.l.b16 %v112
    %v191 = vunpack.c.h.b16 %v112
    %v192 = vunpack.c.l.b16 %v113
    %v193 = vunpack.c.h.b16 %v113
    %v194 = vunpack.c.l.b16 %v114
    %v195 = vunpack.c.h.b16 %v114
    %v196 = vunpack.c.l.b16 %v115
    %v197 = vunpack.c.h.b16 %v115
    %v198 = vunpack.c.l.b16 %v116
    %v199 = vunpack.c.h.b16 %v116
    %v200 = vunpack.c.l.b16 %v117
    %v201 = vunpack.c.h.b16 %v117
    %v202 = vunpack.c.l.b16 %v118
    %v203 = vunpack.c.h.b16 %v118
    %v204 = vunpack.c.l.b16 %v119
    %v205 = vunpack.c.h.b16 %v119
    %v206 = vunpack.c.l.b16 %v120
    %v207 = vunpack.c.h.b16 %v120
    %v208 = vunpack.c.l.b16 %v121
    %v209 = vunpack.c.h.b16 %v121
    %v210 = vunpack.c.l.b16 %v122
    %v211 = vunpack.c.h.b16 %v122
    %v212 = vunpack.c.l.b16 %v123
    %v213 = vunpack.c.h.b16 %v123
    %v214 = vunpack.c.l.b16 %v124
    %v215 = vunpack.c.h.b16 %v124
    %v216 = vunpack.c.l.b16 %v125
    %v217 = vunpack.c.h.b16 %v125
    %v218 = vunpack.c.l.b16 %v126
    %v219 = vunpack.c.h.b16 %v126
    %v220 = vunpack.c.l.b16 %v127
    %v221 = vunpack.c.h.b16 %v127
    %v222 = vunpack.c.l.b16 %v128
    %v223 = vunpack.c.h.b16 %v128
    %v224 = vunpack.c.l.b16 %v129
    %v225 = vunpack.c.h.b16 %v129
    %v226 = vunpack.c.l.b16 %v130
    %v227 = vunpack.c.h.b16 %v130
    %v228 = vunpack.c.l.b16 %v131
    %v229 = vunpack.c.h.b16 %v131
    %v230 = vunpack.c.l.b16 %v132
    %v231 = vunpack.c.h.b16 %v132
    %v232 = vunpack.c.l.b16 %v133
    %v233 = vunpack.c.h.b16 %v133
    %v234 = vunpack.c.l.b16 %v134
    %v235 = vunpack.c.h.b16 %v134
    %v236 = vunpack.c.l.b16 %v135
    %v237 = vunpack.c.h.b16 %v135
    %v238 = vpack.c.b16 %v176, %v174
    %v239 = vpack.c.b16 %v177, %v175
    %v240 = vpack.c.b16 %v180, %v178
    %v241 = vpack.c.b16 %v181, %v179
    %v242 = vpack.c.b16 %v184, %v182
    %v243 = vpack.c.b16 %v185, %v183
    %v244 = vpack.c.b16 %v188, %v186
    %v245 = vpack.c.b16 %v189, %v187
    %v246 = vpack.c.b16 %v192, %v190
    %v247 = vpack.c.b16 %v193, %v191
    %v248 = vpack.c.b16 %v196, %v194
    %v249 = vpack.c.b16 %v197, %v195
    %v250 = vpack.c.b16 %v200, %v198
    %v251 = vpack.c.b16 %v201, %v199
    %v252 = vpack.c.b16 %v204, %v202
    %v253 = vpack.c.b16 %v205, %v203
    %v254 = vpack.c.b16 %v208, %v206
    %v255 = vpack.c.b16 %v209, %v207
    %v256 = vpack.c.b16 %v212, %v210
    %v257 = vpack.c.b16 %v213, %v211
    %v258 = vpack.c.b16 %v216, %v214
    %v259 = vpack.c.b16 %v217, %v215
    %v260 = vpack.c.b16 %v220, %v218
    %v261 = vpack.c.b16 %v221, %v219
    %v262 = vpack.c.b16 %v224, %v222
    %v263 = vpack.c.b16 %v225, %v223
    %v264 = vpack.c.b16 %v228, %v226
    %v265 = vpack.c.b16 %v229, %v227
    %v266 = vpack.c.b16 %v232, %v230
    %v267 = vpack.c.b16 %v233, %v231
    %v268 = vpack.c.b16 %v236, %v234
    %v269 = vpack.c.b16 %v237, %v235
    %302 = vmatpush.bf16.msra.mxu0 %v252
    %303 = vmatpush.bf16.msra.mxu0 %v250
    %304 = vmatpush.bf16.msra.mxu0 %v248
    %305 = vmatpush.bf16.msra.mxu0 %v246
    %306 = vmatpush.bf16.msra.mxu0 %v244
    %307 = vmatpush.bf16.msra.mxu0 %v242
    %308 = vmatpush.bf16.msra.mxu0 %v240
    %309 = vmatpush.bf16.msra.mxu0 %v238
    %310 = vmatmul.bf16.gmra.mxu0 %v102
    %v311 = vpop.f32.mrf.mxu0
    %v312 = vadd.f32 %v138, %v311
    %v313 = vpop.f32.mrf.mxu0
    %314 = vdwg.mxu0
    %315 = vmatpush.bf16.msra.mxu0 %v268
    %316 = vmatpush.bf16.msra.mxu0 %v266
    %317 = vmatpush.bf16.msra.mxu0 %v264
    %318 = vmatpush.bf16.msra.mxu0 %v262
    %319 = vmatpush.bf16.msra.mxu0 %v260
    %320 = vmatpush.bf16.msra.mxu0 %v258
    %321 = vmatpush.bf16.msra.mxu0 %v256
    %322 = vmatpush.bf16.msra.mxu0 %v254
    %323 = vmatmul.bf16.gmra.mxu0 %v103
    %v324 = vpop.f32.mrf.mxu0
    %v325 = vadd.f32 %v312, %v324
    %v326 = vpop.f32.mrf.mxu0
    %327 = vdwg.mxu0
    %328 = vmatpush.bf16.msra.mxu0 %v253
    %329 = vmatpush.bf16.msra.mxu0 %v251
    %330 = vmatpush.bf16.msra.mxu0 %v249
    %331 = vmatpush.bf16.msra.mxu0 %v247
    %332 = vmatpush.bf16.msra.mxu0 %v245
    %333 = vmatpush.bf16.msra.mxu0 %v243
    %334 = vmatpush.bf16.msra.mxu0 %v241
    %335 = vmatpush.bf16.msra.mxu0 %v239
    %336 = vmatmul.bf16.gmra.mxu0 %v102
    %v337 = vpop.f32.mrf.mxu0
    %v338 = vadd.f32 %v139, %v337
    %v339 = vpop.f32.mrf.mxu0
    %340 = vdwg.mxu0
    %341 = vmatpush.bf16.msra.mxu0 %v269
    %342 = vmatpush.bf16.msra.mxu0 %v267
    %343 = vmatpush.bf16.msra.mxu0 %v265
    %344 = vmatpush.bf16.msra.mxu0 %v263
    %345 = vmatpush.bf16.msra.mxu0 %v261
    %346 = vmatpush.bf16.msra.mxu0 %v259
    %347 = vmatpush.bf16.msra.mxu0 %v257
    %348 = vmatpush.bf16.msra.mxu0 %v255
    %349 = vmatmul.bf16.gmra.mxu0 %v103
    %v350 = vpop.f32.mrf.mxu0
    %v351 = vadd.f32 %v338, %v350
    %v352 = vpop.f32.mrf.mxu0
    %353 = vdwg.mxu0
    %v354 = vmax.f32 %v325, 0.0
    %v355 = vmax.f32 %v351, 0.0
    %v356 = vld [vmem:[%s6] sm:$0x3]
    %v358 = vperm.slane %v356, 0
    %v359 = vperm.slane %v356, 1
    %v362 = vmul.f32 %v354, %v358
    %v363 = vmul.f32 %v355, %v359
    %v364 = vadd.f32 %v362, %v363
    %365 = vadd.xlane.f32.xlu0 %v364
    %v366 = vpop.xlane.xlu0 %365
    %s367 = sld [smem:[#allocation2]]
    %v368 = vstv %s367
    %v369 = vadd.f32 %v366, %v368
    %vm370 = vcmask 7168
    %371 = vst.msk [vmem:[%s8] sm:$0xff] %vm370, %v369
    // Predicated region
    $region38: #{tpu_custom_call.1} parent=1 // pred_check
      _
    $region39: #{tpu_custom_call.1} parent=1 // pred_check_branch
      %373 = sbr.rel (0) target = $region41
    $region40: #{tpu_custom_call.1} parent=1 // pred_region
      _
    $region41: #{tpu_custom_call.1} parent=1 // pred_fallthru
      _
    // Predicated region
    $region42: #{tpu_custom_call.1} parent=1 // pred_check
      _
    $region43: #{tpu_custom_call.1} parent=1 // pred_check_branch
      %375 = sbr.rel (0) target = $region45
    $region44: #{tpu_custom_call.1} parent=1 // pred_region
      _
    $region45: #{tpu_custom_call.1} parent=1 // pred_fallthru
      _
    %376 = vsyncpa [#allocation4], 1

</llo_original>
